<compile_context>
chip_gen: v6e
topology: v6e:2x2x1
jax: 0.10.0
libtpu: 0.0.40
codegen_flags: <defaults>
</compile_context>

<pallas_src>
import functools

import jax
import jax.numpy as jnp
from jax.experimental import pallas as pl
from jax.experimental.pallas import tpu as pltpu

LN_EPS = 1e-5  # torch.nn.LayerNorm default


def _round_up(x, m):
    return ((x + m - 1) // m) * m


def _qkv_kernel(x_ref, w1_ref, aff_ref, w2_ref, b2_ref, o_ref, *, h_true):
    # x_ref   : (bm, D_in)     f32
    # w1_ref  : (D_in, H_pad)  bf16   (padded cols are zero)
    # aff_ref : (3, H_pad)     f32    rows = [fc1 bias, ln gamma, ln beta] (pads zero)
    # w2_ref  : (H_pad, E_pad) bf16   (padded rows/cols are zero)
    # b2_ref  : (1, E_pad)     f32
    # o_ref   : (bm, E_pad)    f32
    h_pad = w1_ref.shape[1]

    # fc1 (bf16 MXU, f32 accumulate) + bias + SiLU (f32 on VPU/EUP)
    h = jnp.dot(x_ref[...].astype(jnp.bfloat16), w1_ref[...],
                preferred_element_type=jnp.float32)
    h = h + aff_ref[0:1, :]
    h = h * jax.nn.sigmoid(h)
    # Padded hidden columns of h are exactly 0 (zero w1 cols, zero b1, SiLU(0)=0)
    # for every valid row, so sums below only see the true hidden width.

    # LayerNorm over the TRUE hidden width (biased variance, like torch).
    inv_h = 1.0 / float(h_true)
    mean = jnp.sum(h, axis=-1, keepdims=True) * inv_h
    c = h - mean
    if h_pad != h_true:
        col = jax.lax.broadcasted_iota(jnp.int32, (1, h_pad), 1)
        c_stat = jnp.where(col < h_true, c, 0.0)   # mask pads out of the variance
    else:
        c_stat = c
    var = jnp.sum(c_stat * c_stat, axis=-1, keepdims=True) * inv_h
    hn = c * jax.lax.rsqrt(var + LN_EPS)
    hn = hn * aff_ref[1:2, :] + aff_ref[2:3, :]     # padded cols -> 0 (gamma/beta pads = 0)

    # TODO(synk): nn.Dropout is identity at inference; training-mode stochastic
    # masking (pltpu.prng_*) is intentionally not implemented here.

    # fc2 (bf16 MXU, f32 accumulate) + bias, single full-width lane-dense store.
    o_ref[...] = (
        jnp.dot(hn.astype(jnp.bfloat16), w2_ref[...],
                preferred_element_type=jnp.float32)
        + b2_ref[...]
    ).astype(o_ref.dtype)


def prepare_params(p):
    """One-time layout prep: lane-pad H/E to multiples of 128, cast weights to bf16."""
    _, H = p["w1"].shape
    E = p["w2"].shape[1]
    H_pad = _round_up(H, 128)
    E_pad = _round_up(E, 128)

    w1 = jnp.pad(p["w1"], ((0, 0), (0, H_pad - H))).astype(jnp.bfloat16)
    w2 = jnp.pad(p["w2"], ((0, H_pad - H), (0, E_pad - E))).astype(jnp.bfloat16)
    aff = jnp.pad(
        jnp.concatenate([p["b1"], p["gamma"], p["beta"]], axis=0),
        ((0, 0), (0, H_pad - H)),
    ).astype(jnp.float32)
    b2 = jnp.pad(p["b2"], ((0, 0), (0, E_pad - E))).astype(jnp.float32)
    prep = {"w1": w1, "aff": aff, "w2": w2, "b2": b2}
    return prep, int(H), int(E)


@functools.partial(jax.jit, static_argnames=("hidden", "n_embd", "block_m"))
def qkv_pallas(prep, x, *, hidden, n_embd, block_m=512):
    """x: (B, T, input_dim) f32  ->  (B, T, n_embd) f32."""
    B, T, D_in = x.shape
    H_pad = prep["w1"].shape[1]
    E_pad = prep["w2"].shape[1]

    M = B * T
    x2 = x.reshape(M, D_in)

    # Row block: multiple of 8, at least 2 grid steps when possible (so the
    # "parallel" axis feeds both TensorCores on v7x), capped by block_m.
    bm = min(block_m, max(8, _round_up(pl.cdiv(M, 2), 8)))

    # Cap bm against a VMEM budget (v7x has only 64 MiB physical VMEM).
    resident_bytes = (D_in * H_pad + H_pad * E_pad) * 2 + (3 * H_pad + E_pad) * 4
    def _step_bytes(b):
        # double-buffered x and out blocks (f32) + ~2 live (bm, H_pad) f32 intermediates
        return 4 * (2 * b * D_in + 2 * b * E_pad + 2 * b * H_pad)
    VMEM_BUDGET = 24 * 1024 * 1024
    while bm > 8 and resident_bytes + _step_bytes(bm) > VMEM_BUDGET:
        bm = max(8, _round_up(bm // 2, 8))
    # TODO(synk): if the resident weights themselves ever outgrow the budget,
    # add a K grid axis (last, "arbitrary") with a VMEM accumulator + pl.when
    # init/finalize instead of shrinking bm further.

    grid = (pl.cdiv(M, bm),)   # ragged last block handled by Pallas (masked store)
    vmem_limit = int(min(48 << 20,
                         max(16 << 20, resident_bytes + _step_bytes(bm) + (4 << 20))))

    kernel = functools.partial(_qkv_kernel, h_true=hidden)

    in_specs = [
        pl.BlockSpec((bm, D_in), lambda i: (i, 0)),      # x row-block
        pl.BlockSpec((D_in, H_pad), lambda i: (0, 0)),   # w1 (resident, bf16)
        pl.BlockSpec((3, H_pad), lambda i: (0, 0)),      # [b1; gamma; beta]
        pl.BlockSpec((H_pad, E_pad), lambda i: (0, 0)),  # w2 (resident, bf16)
        pl.BlockSpec((1, E_pad), lambda i: (0, 0)),      # b2
    ]
    out_specs = pl.BlockSpec((bm, E_pad), lambda i: (i, 0))
    out_shape = jax.ShapeDtypeStruct((M, E_pad), jnp.float32)

    flops = 2 * M * (D_in * H_pad + H_pad * E_pad) + 12 * M * H_pad
    transcendentals = M * H_pad + M                     # sigmoid + rsqrt
    bytes_accessed = (
        4 * (M * D_in + M * E_pad + 3 * H_pad + E_pad)  # f32 activations + vectors
        + 2 * (D_in * H_pad + H_pad * E_pad)            # bf16 weights
    )

    y = pl.pallas_call(
        kernel,
        grid_spec=pltpu.PrefetchScalarGridSpec(
            num_scalar_prefetch=0,
            grid=grid,
            in_specs=in_specs,
            out_specs=out_specs,
        ),
        out_shape=out_shape,
        compiler_params=pltpu.CompilerParams(
            dimension_semantics=("parallel",),
            vmem_limit_bytes=vmem_limit,
        ),
        cost_estimate=pl.CostEstimate(
            flops=flops,
            transcendentals=transcendentals,
            bytes_accessed=bytes_accessed,
        ),
    )(x2, prep["w1"], prep["aff"], prep["w2"], prep["b2"])

    if E_pad != n_embd:
        y = y[:, :n_embd]
    return y.reshape(B, T, n_embd)


# ----------------------------- pure-JAX reference -----------------------------
def qkv_ref(p, x):
    h = x @ p["w1"] + p["b1"]
    h = h * jax.nn.sigmoid(h)                      # SiLU
    mean = jnp.mean(h, axis=-1, keepdims=True)
    var = jnp.mean((h - mean) ** 2, axis=-1, keepdims=True)
    hn = (h - mean) / jnp.sqrt(var + LN_EPS)
    hn = hn * p["gamma"] + p["beta"]
    # dropout: identity in eval mode
    return hn @ p["w2"] + p["b2"]


# ----------------------------- deterministic params -----------------------------
def init_params(key, input_dim, n_embd):
    hidden = (input_dim + n_embd) // 2
    k1, k2, k3, k4 = jax.random.split(key, 4)

    def linear(k, fan_in, fan_out):
        kw, kb = jax.random.split(k)
        bound = 1.0 / jnp.sqrt(jnp.float32(fan_in))
        w = jax.random.uniform(kw, (fan_in, fan_out), jnp.float32, -bound, bound)
        b = jax.random.uniform(kb, (1, fan_out), jnp.float32, -bound, bound)
        return w, b

    p = {}
    p["w1"], p["b1"] = linear(k1, input_dim, hidden)
    p["w2"], p["b2"] = linear(k2, hidden, n_embd)
    # torch LayerNorm defaults are gamma=1, beta=0; perturb slightly so the
    # affine path is actually exercised (deterministic, not a checkpoint).
    p["gamma"] = 1.0 + 0.1 * jax.random.normal(k3, (1, hidden), jnp.float32)
    p["beta"] = 0.1 * jax.random.normal(k4, (1, hidden), jnp.float32)
    return p


if __name__ == "__main__":
    B, T = 2, 16
    input_dim, n_embd = 32, 32               # (input_dim + n_embd) % 2 == 0
    assert (input_dim + n_embd) % 2 == 0

    key = jax.random.PRNGKey(0)
    k_params, k_x = jax.random.split(key)

    params = init_params(k_params, input_dim, n_embd)
    x = jax.random.normal(k_x, (B, T, input_dim), jnp.float32)

    prep, hidden, n_embd_true = prepare_params(params)
    y = qkv_pallas(prep, x, hidden=hidden, n_embd=n_embd_true)
    y = jax.block_until_ready(y)

    ref = qkv_ref(params, x)
    assert y.shape == (B, T, n_embd), y.shape
    # bf16 MXU operands -> slightly looser tolerance than a pure-f32 check.
    assert jnp.allclose(y, ref, rtol=3e-2, atol=3e-2), float(jnp.max(jnp.abs(y - ref)))

    print("KERNEL_OK")
</pallas_src>

<mosaic_0001>
module attributes {stable_mosaic.version = 11 : i64} {
  func.func @_qkv_kernel(%arg0: i32, %arg1: memref<16x32xf32, #tpu.memory_space<vmem>>, %arg2: memref<32x128xbf16, #tpu.memory_space<vmem>>, %arg3: memref<3x128xf32, #tpu.memory_space<vmem>>, %arg4: memref<128x128xbf16, #tpu.memory_space<vmem>>, %arg5: memref<1x128xf32, #tpu.memory_space<vmem>>, %arg6: memref<16x128xf32, #tpu.memory_space<vmem>>) attributes {dimension_semantics = [#tpu.dimension_semantics<parallel>], iteration_bounds = array<i64: 2>, scalar_prefetch = 0 : i64, scratch_operands = 0 : i64, tpu.core_type = #tpu.core_type<tc>, window_params = [{transform_indices = @transform_0, window_bounds = array<i64: 16, 32>}, {pipeline_mode = #tpu.pipeline_mode<synchronous>, transform_indices = @transform_1, window_bounds = array<i64: 32, 128>}, {pipeline_mode = #tpu.pipeline_mode<synchronous>, transform_indices = @transform_2, window_bounds = array<i64: 3, 128>}, {pipeline_mode = #tpu.pipeline_mode<synchronous>, transform_indices = @transform_3, window_bounds = array<i64: 128, 128>}, {pipeline_mode = #tpu.pipeline_mode<synchronous>, transform_indices = @transform_4, window_bounds = array<i64: 1, 128>}, {transform_indices = @transform_5, window_bounds = array<i64: 16, 128>}]} {
    %c0 = arith.constant 0 : index
    %c0_0 = arith.constant 0 : index
    %0 = vector.load %arg1[%c0, %c0_0] : memref<16x32xf32, #tpu.memory_space<vmem>>, vector<16x32xf32>
    %1 = arith.truncf %0 : vector<16x32xf32> to vector<16x32xbf16>
    %c0_1 = arith.constant 0 : index
    %c0_2 = arith.constant 0 : index
    %2 = vector.load %arg2[%c0_1, %c0_2] : memref<32x128xbf16, #tpu.memory_space<vmem>>, vector<32x128xbf16>
    %cst = arith.constant dense<0.000000e+00> : vector<16x128xf32>
    %3 = tpu.matmul %1, %2, %cst {dimension_numbers = #tpu.dot_dimension_numbers<[1], [0], [0], [1], [0, 0, 1, 1], [], []>} : vector<16x32xbf16>, vector<32x128xbf16>, vector<16x128xf32> -> vector<16x128xf32>
    %c0_3 = arith.constant 0 : index
    %c0_4 = arith.constant 0 : index
    %4 = vector.load %arg3[%c0_3, %c0_4] : memref<3x128xf32, #tpu.memory_space<vmem>>, vector<1x128xf32>
    %5 = vector.broadcast %4 : vector<1x128xf32> to vector<16x128xf32>
    %6 = arith.addf %3, %5 : vector<16x128xf32>
    %7 = arith.negf %6 : vector<16x128xf32>
    %8 = math.exp %7 : vector<16x128xf32>
    %cst_5 = arith.constant 1.000000e+00 : f32
    %9 = vector.broadcast %cst_5 : f32 to vector<16x128xf32>
    %10 = arith.addf %9, %8 : vector<16x128xf32>
    %11 = arith.divf %9, %10 : vector<16x128xf32>
    %12 = arith.mulf %6, %11 : vector<16x128xf32>
    %cst_6 = arith.constant dense<0.000000e+00> : vector<16xf32>
    %13 = vector.multi_reduction <add>, %12, %cst_6 [1] : vector<16x128xf32> to vector<16xf32>
    %14 = vector.shape_cast %13 : vector<16xf32> to vector<16x1xf32>
    %cst_7 = arith.constant 3.125000e-02 : f32
    %15 = vector.broadcast %cst_7 : f32 to vector<16x1xf32>
    %16 = arith.mulf %14, %15 : vector<16x1xf32>
    %17 = vector.broadcast %16 : vector<16x1xf32> to vector<16x128xf32>
    %18 = arith.subf %12, %17 : vector<16x128xf32>
    %19 = tpu.iota {dimensions = array<i32: 1>} : vector<1x128xi32>
    %c32_i32 = arith.constant 32 : i32
    %20 = vector.broadcast %c32_i32 : i32 to vector<1x128xi32>
    %21 = arith.cmpi slt, %19, %20 : vector<1x128xi32>
    %cst_8 = arith.constant 0.000000e+00 : f32
    %22 = vector.shape_cast %21 : vector<1x128xi1> to vector<1x128xi1>
    %23 = vector.broadcast %22 : vector<1x128xi1> to vector<16x128xi1>
    %24 = vector.broadcast %cst_8 : f32 to vector<16x128xf32>
    %25 = arith.select %23, %18, %24 : vector<16x128xi1>, vector<16x128xf32>
    %26 = arith.mulf %25, %25 : vector<16x128xf32>
    %cst_9 = arith.constant dense<0.000000e+00> : vector<16xf32>
    %27 = vector.multi_reduction <add>, %26, %cst_9 [1] : vector<16x128xf32> to vector<16xf32>
    %28 = vector.shape_cast %27 : vector<16xf32> to vector<16x1xf32>
    %cst_10 = arith.constant 3.125000e-02 : f32
    %29 = vector.broadcast %cst_10 : f32 to vector<16x1xf32>
    %30 = arith.mulf %28, %29 : vector<16x1xf32>
    %cst_11 = arith.constant 9.99999974E-6 : f32
    %31 = vector.broadcast %cst_11 : f32 to vector<16x1xf32>
    %32 = arith.addf %30, %31 : vector<16x1xf32>
    %33 = math.rsqrt %32 : vector<16x1xf32>
    %34 = vector.broadcast %33 : vector<16x1xf32> to vector<16x128xf32>
    %35 = arith.mulf %18, %34 : vector<16x128xf32>
    %c1 = arith.constant 1 : index
    %c0_12 = arith.constant 0 : index
    %36 = vector.load %arg3[%c1, %c0_12] : memref<3x128xf32, #tpu.memory_space<vmem>>, vector<1x128xf32>
    %37 = vector.broadcast %36 : vector<1x128xf32> to vector<16x128xf32>
    %38 = arith.mulf %35, %37 : vector<16x128xf32>
    %c2 = arith.constant 2 : index
    %c0_13 = arith.constant 0 : index
    %39 = vector.load %arg3[%c2, %c0_13] : memref<3x128xf32, #tpu.memory_space<vmem>>, vector<1x128xf32>
    %40 = vector.broadcast %39 : vector<1x128xf32> to vector<16x128xf32>
    %41 = arith.addf %38, %40 : vector<16x128xf32>
    %42 = arith.truncf %41 : vector<16x128xf32> to vector<16x128xbf16>
    %c0_14 = arith.constant 0 : index
    %c0_15 = arith.constant 0 : index
    %43 = vector.load %arg4[%c0_14, %c0_15] : memref<128x128xbf16, #tpu.memory_space<vmem>>, vector<128x128xbf16>
    %cst_16 = arith.constant dense<0.000000e+00> : vector<16x128xf32>
    %44 = tpu.matmul %42, %43, %cst_16 {dimension_numbers = #tpu.dot_dimension_numbers<[1], [0], [0], [1], [0, 0, 1, 1], [], []>} : vector<16x128xbf16>, vector<128x128xbf16>, vector<16x128xf32> -> vector<16x128xf32>
    %c0_17 = arith.constant 0 : index
    %c0_18 = arith.constant 0 : index
    %45 = vector.load %arg5[%c0_17, %c0_18] : memref<1x128xf32, #tpu.memory_space<vmem>>, vector<1x128xf32>
    %46 = vector.broadcast %45 : vector<1x128xf32> to vector<16x128xf32>
    %47 = arith.addf %44, %46 : vector<16x128xf32>
    %c0_19 = arith.constant 0 : index
    %c0_20 = arith.constant 0 : index
    %48 = vector.load %arg6[%c0_19, %c0_20] : memref<16x128xf32, #tpu.memory_space<vmem>>, vector<16x128xf32>
    tpu.vector_store %arg6[%c0_19, %c0_20], %47 {strides = array<i32>} : memref<16x128xf32, #tpu.memory_space<vmem>>, vector<16x128xf32>,
    return
  }
  func.func @transform_0(%arg0: i32) -> (i32, i32) {
    %c0_i32 = arith.constant 0 : i32
    %c0_i32_0 = arith.constant 0 : i32
    return %arg0, %c0_i32 : i32, i32
  }
  func.func @transform_1(%arg0: i32) -> (i32, i32) {
    %c0_i32 = arith.constant 0 : i32
    %c0_i32_0 = arith.constant 0 : i32
    %c0_i32_1 = arith.constant 0 : i32
    return %c0_i32, %c0_i32_0 : i32, i32
  }
  func.func @transform_2(%arg0: i32) -> (i32, i32) {
    %c0_i32 = arith.constant 0 : i32
    %c0_i32_0 = arith.constant 0 : i32
    %c0_i32_1 = arith.constant 0 : i32
    return %c0_i32, %c0_i32_0 : i32, i32
  }
  func.func @transform_3(%arg0: i32) -> (i32, i32) {
    %c0_i32 = arith.constant 0 : i32
    %c0_i32_0 = arith.constant 0 : i32
    %c0_i32_1 = arith.constant 0 : i32
    return %c0_i32, %c0_i32_0 : i32, i32
  }
  func.func @transform_4(%arg0: i32) -> (i32, i32) {
    %c0_i32 = arith.constant 0 : i32
    %c0_i32_0 = arith.constant 0 : i32
    %c0_i32_1 = arith.constant 0 : i32
    return %c0_i32, %c0_i32_0 : i32, i32
  }
  func.func @transform_5(%arg0: i32) -> (i32, i32) {
    %c0_i32 = arith.constant 0 : i32
    %c0_i32_0 = arith.constant 0 : i32
    return %arg0, %c0_i32 : i32, i32
  }
}

</mosaic_0001>

<llo_original>
// kernel: qkv_pallas.1
$region0: #{qkv_pallas.1}
  #allocation0 [shape = 'u32[]', space=smem, size = 0x4, offset = 0x4, fixed_abs, tag = 'smem constant byte address 0x4 - core index']
  #allocation1 [shape = 'u32[144,128]{1,0:T(1,128)}', space=vmem, size = 0x12000, scoped, tag = 'internal scratch']
  %s0 = inlined_call_operand.hbm [shape: f32[32,32], index: 0, kind: input, shape index: {}]
  %s1 = inlined_call_operand.hbm [shape: bf16[32,128], index: 1, kind: input, shape index: {}]
  %s2 = inlined_call_operand.hbm [shape: f32[3,128], index: 2, kind: input, shape index: {}]
  %s3 = inlined_call_operand.hbm [shape: bf16[128,128], index: 3, kind: input, shape index: {}]
  %s4 = inlined_call_operand.vmem [shape: f32[1,128], index: 4, kind: input, shape index: {}]
  %s5 = inlined_call_operand.hbm [shape: f32[32,128], index: 5, kind: output, shape index: {}]
  %s6 = sld [smem:[#allocation0]]
  $region69: #{qkv_pallas.1} parent=0
    _
  %s8 = ssub.s32 1, %s6
  %s9 = scalar_select 0, %s8, %s6
  $region1: #{qkv_pallas.1} parent=0
    #allocation2 [shape = 'u8[16384]{0}', space=vmem, size = 0x4000, scoped, tag = 'input window, operand 0']
    #allocation3 [shape = 's32[2]{0}', space=sflag, size = 0x8, scoped, tag = 'scoped memory for qkv_pallas.1']
    #allocation4 [shape = 's32[2]{0}', space=sflag, size = 0x8, scoped, tag = 'scoped memory for qkv_pallas.1']
    #allocation5 [shape = 'u8[8192]{0}', space=vmem, size = 0x2000, scoped, tag = 'input window, operand 1, single buffered']
    #allocation6 [shape = 's32[1]{0}', space=sflag, size = 0x4, scoped, tag = 'scoped memory for qkv_pallas.1']
    #allocation7 [shape = 'u8[2048]{0}', space=vmem, size = 0x800, scoped, tag = 'input window, operand 2, single buffered']
    #allocation8 [shape = 'u8[32768]{0}', space=vmem, size = 0x8000, scoped, tag = 'input window, operand 3, single buffered']
    #allocation9 [shape = 's32[1]{0}', space=sflag, size = 0x4, scoped, tag = 'scoped memory for qkv_pallas.1']
    #allocation10 [shape = 'u8[16384]{0}', space=vmem, size = 0x4000, scoped, tag = 'output window, operand 0']
    %10 = vsyncpa [#allocation3], 0
    %s11 = scalar_lea.sflag [#allocation3], 1
    %12 = vsyncpa %s11, 0
    %13 = vsyncpa [#allocation6], 0
    %14 = vsyncpa [#allocation9], 0
    %15 = vsyncpa [#allocation4], 0
    %s16 = scalar_lea.sflag [#allocation4], 1
    %17 = vsyncpa %s16, 0
    loop: start=0, step=1, limit=4
    $region2: #{qkv_pallas.1} parent=1 // loop_pre_header
      _
    $region3: #{qkv_pallas.1} parent=1 // loop_header
      %s19 = sphi 0, %s23
      %p20 = scmp.ge.s32.totalorder %s19, 4
      %s29 = sphi 0, %s31
      %s32 = sphi 0, %s29
      %s33 = sphi 0, %s32
      %s49 = sphi 0, %s33
      %s53 = sphi 0, %s53
      %s55 = sphi 0, %s53
      %s56 = sphi 0, %s55
      %s70 = sphi 0, %s56
      %s74 = sphi 0, %s74
      %s76 = sphi 0, %s74
      %s77 = sphi 0, %s76
      %s91 = sphi 0, %s77
      %s95 = sphi 0, %s95
      %s97 = sphi 0, %s95
      %s98 = sphi 0, %s97
      %s112 = sphi 0, %s98
      %s116 = sphi 0, %s116
      %s118 = sphi 0, %s116
      %s119 = sphi 0, %s118
      %s133 = sphi 0, %s119
      %s139 = sphi 0, %s141
      %s142 = sphi 0, %s139
      %s143 = sphi 0, %s142
      %s159 = sphi 0, %s143
    $region4: #{qkv_pallas.1} parent=1 // loop_header_branch
      %22 = sbr.rel (%p20) target = $region8
    $region5: #{qkv_pallas.1} parent=1 // loop_body
      %s24 = ssub.s32 %s19, 1
      %s25 = ssub.s32 %s19, 2
      %s26 = sadd.s32 %s19, 1
      %s27 = ssub.s32 %s19, %s26
      %p28 = scmp.eq.s32.totalorder %s27, 0
      %s30 = sadd.s32 %s29, 1
      %s31 = scalar_select %p28, %s29, %s30
      %p34 = pneg %p28
      %p35 = scmp.eq.s32.totalorder %s19, 1
      %p36 = por %p34, %p35
      %p37 = scmp.ne.s32.totalorder %s29, %s32
      %p38 = scmp.eq.s32.totalorder %s19, 0
      %p39 = por %p37, %p38
      %p40 = scmp.ne.s32.totalorder %s29, %s32
      %p41 = scmp.eq.s32.totalorder %s24, 1
      %p42 = por %p40, %p41
      %p43 = scmp.ne.s32.totalorder %s32, %s33
      %p44 = scmp.eq.s32.totalorder %s24, 0
      %p45 = por %p43, %p44
      %p46 = scmp.ne.s32.totalorder %s32, %s33
      %p47 = scmp.eq.s32.totalorder %s25, 1
      %p48 = por %p46, %p47
      %p50 = scmp.ne.s32.totalorder %s33, %s49
      %p51 = scmp.eq.s32.totalorder %s25, 0
      %p52 = por %p50, %p51
      %s54 = sadd.s32 %s53, 1
      %p57 = scmp.eq.s32.totalorder %s19, 1
      %p58 = scmp.ne.s32.totalorder %s53, %s55
      %p59 = scmp.eq.s32.totalorder %s19, 0
      %p60 = por %p58, %p59
      %p61 = scmp.ne.s32.totalorder %s53, %s55
      %p62 = scmp.eq.s32.totalorder %s24, 1
      %p63 = por %p61, %p62
      %p64 = scmp.ne.s32.totalorder %s55, %s56
      %p65 = scmp.eq.s32.totalorder %s24, 0
      %p66 = por %p64, %p65
      %p67 = scmp.ne.s32.totalorder %s55, %s56
      %p68 = scmp.eq.s32.totalorder %s25, 1
      %p69 = por %p67, %p68
      %p71 = scmp.ne.s32.totalorder %s56, %s70
      %p72 = scmp.eq.s32.totalorder %s25, 0
      %p73 = por %p71, %p72
      %s75 = sadd.s32 %s74, 1
      %p78 = scmp.eq.s32.totalorder %s19, 1
      %p79 = scmp.ne.s32.totalorder %s74, %s76
      %p80 = scmp.eq.s32.totalorder %s19, 0
      %p81 = por %p79, %p80
      %p82 = scmp.ne.s32.totalorder %s74, %s76
      %p83 = scmp.eq.s32.totalorder %s24, 1
      %p84 = por %p82, %p83
      %p85 = scmp.ne.s32.totalorder %s76, %s77
      %p86 = scmp.eq.s32.totalorder %s24, 0
      %p87 = por %p85, %p86
      %p88 = scmp.ne.s32.totalorder %s76, %s77
      %p89 = scmp.eq.s32.totalorder %s25, 1
      %p90 = por %p88, %p89
      %p92 = scmp.ne.s32.totalorder %s77, %s91
      %p93 = scmp.eq.s32.totalorder %s25, 0
      %p94 = por %p92, %p93
      %s96 = sadd.s32 %s95, 1
      %p99 = scmp.eq.s32.totalorder %s19, 1
      %p100 = scmp.ne.s32.totalorder %s95, %s97
      %p101 = scmp.eq.s32.totalorder %s19, 0
      %p102 = por %p100, %p101
      %p103 = scmp.ne.s32.totalorder %s95, %s97
      %p104 = scmp.eq.s32.totalorder %s24, 1
      %p105 = por %p103, %p104
      %p106 = scmp.ne.s32.totalorder %s97, %s98
      %p107 = scmp.eq.s32.totalorder %s24, 0
      %p108 = por %p106, %p107
      %p109 = scmp.ne.s32.totalorder %s97, %s98
      %p110 = scmp.eq.s32.totalorder %s25, 1
      %p111 = por %p109, %p110
      %p113 = scmp.ne.s32.totalorder %s98, %s112
      %p114 = scmp.eq.s32.totalorder %s25, 0
      %p115 = por %p113, %p114
      %s117 = sadd.s32 %s116, 1
      %p120 = scmp.eq.s32.totalorder %s19, 1
      %p121 = scmp.ne.s32.totalorder %s116, %s118
      %p122 = scmp.eq.s32.totalorder %s19, 0
      %p123 = por %p121, %p122
      %p124 = scmp.ne.s32.totalorder %s116, %s118
      %p125 = scmp.eq.s32.totalorder %s24, 1
      %p126 = por %p124, %p125
      %p127 = scmp.ne.s32.totalorder %s118, %s119
      %p128 = scmp.eq.s32.totalorder %s24, 0
      %p129 = por %p127, %p128
      %p130 = scmp.ne.s32.totalorder %s118, %s119
      %p131 = scmp.eq.s32.totalorder %s25, 1
      %p132 = por %p130, %p131
      %p134 = scmp.ne.s32.totalorder %s119, %s133
      %p135 = scmp.eq.s32.totalorder %s25, 0
      %p136 = por %p134, %p135
      %s137 = ssub.s32 %s19, %s26
      %p138 = scmp.eq.s32.totalorder %s137, 0
      %s140 = sadd.s32 %s139, 1
      %s141 = scalar_select %p138, %s139, %s140
      %p144 = pneg %p138
      %p145 = scmp.eq.s32.totalorder %s19, 1
      %p146 = por %p144, %p145
      %p147 = scmp.ne.s32.totalorder %s139, %s142
      %p148 = scmp.eq.s32.totalorder %s19, 0
      %p149 = por %p147, %p148
      %p150 = scmp.ne.s32.totalorder %s139, %s142
      %p151 = scmp.eq.s32.totalorder %s24, 1
      %p152 = por %p150, %p151
      %p153 = scmp.ne.s32.totalorder %s142, %s143
      %p154 = scmp.eq.s32.totalorder %s24, 0
      %p155 = por %p153, %p154
      %p156 = scmp.ne.s32.totalorder %s142, %s143
      %p157 = scmp.eq.s32.totalorder %s25, 1
      %p158 = por %p156, %p157
      %p160 = scmp.ne.s32.totalorder %s143, %s159
      %p161 = scmp.eq.s32.totalorder %s25, 0
      %p162 = por %p160, %p161
      %p163 = scmp.le.s32.totalorder 1, %s19
      %p164 = scmp.lt.s32.totalorder %s19, 3
      %p165 = pnand %p163, %p164
      %p166 = pneg %p165
      // Predicated region
      $region9: #{qkv_pallas.1} parent=5 // pred_check
        _
      $region10: #{qkv_pallas.1} parent=5 // pred_check_branch
        %168 = sbr.rel (%p165) target = $region12
      $region11: #{qkv_pallas.1} parent=5 // pred_region
        %s169 = ssub.s32 %s19, 1
        // Predicated region
        $region13: #{qkv_pallas.1} parent=11 // pred_check
          %p170 = pneg %p66
        $region14: #{qkv_pallas.1} parent=11 // pred_check_branch
          %172 = sbr.rel (%p170) target = $region16
        $region15: #{qkv_pallas.1} parent=11 // pred_region
          %s174 = ssub.s32 256, 256
          %175 = vsyncadd [#allocation6], %s174
          %s176 = sshll.u32 [#allocation5], 4
          %s177 = int_to_ptr.vmem [resolvable:$true] %s176
          %182 = dma.hbm_to_vmem [thread:$0]  %s1, 256, %s177, [#allocation6], 64, 64, 4
        $region16: #{qkv_pallas.1} parent=11 // pred_fallthru
          _
        // Predicated region
        $region17: #{qkv_pallas.1} parent=11 // pred_check
          %p183 = pneg %p87
        $region18: #{qkv_pallas.1} parent=11 // pred_check_branch
          %185 = sbr.rel (%p183) target = $region20
        $region19: #{qkv_pallas.1} parent=11 // pred_region
          %s187 = ssub.s32 64, 64
          %188 = vsyncadd [#allocation6], %s187
          %s190 = sshll.u32 [#allocation7], 4
          %s191 = int_to_ptr.vmem [resolvable:$true] %s190
          %193 = dma.hbm_to_vmem [thread:$0]  %s2, 64, %s191, [#allocation6]
        $region20: #{qkv_pallas.1} parent=11 // pred_fallthru
          _
        // Predicated region
        $region21: #{qkv_pallas.1} parent=11 // pred_check
          %p194 = pneg %p108
        $region22: #{qkv_pallas.1} parent=11 // pred_check_branch
          %196 = sbr.rel (%p194) target = $region24
        $region23: #{qkv_pallas.1} parent=11 // pred_region
          %s198 = ssub.s32 1024, 1024
          %199 = vsyncadd [#allocation9], %s198
          %s200 = sshll.u32 [#allocation8], 4
          %s201 = int_to_ptr.vmem [resolvable:$true] %s200
          %206 = dma.hbm_to_vmem [thread:$0]  %s3, 1024, %s201, [#allocation9], 64, 64, 4
        $region24: #{qkv_pallas.1} parent=11 // pred_fallthru
          _
        // Predicated region
        $region25: #{qkv_pallas.1} parent=11 // pred_check
          %p207 = pneg %p129
        $region26: #{qkv_pallas.1} parent=11 // pred_check_branch
          %209 = sbr.rel (%p207) target = $region28
        $region27: #{qkv_pallas.1} parent=11 // pred_region
          _
        $region28: #{qkv_pallas.1} parent=11 // pred_fallthru
          _
      $region12: #{qkv_pallas.1} parent=5 // pred_fallthru
        _
      %p210 = scmp.lt.s32.totalorder %s19, 2
      // Predicated region
      $region29: #{qkv_pallas.1} parent=5 // pred_check
        %p211 = pneg %p210
      $region30: #{qkv_pallas.1} parent=5 // pred_check_branch
        %213 = sbr.rel (%p211) target = $region32
      $region31: #{qkv_pallas.1} parent=5 // pred_region
        // Predicated region
        $region33: #{qkv_pallas.1} parent=31 // pred_check
          %p214 = pneg %p39
        $region34: #{qkv_pallas.1} parent=31 // pred_check_branch
          %216 = sbr.rel (%p214) target = $region36
        $region35: #{qkv_pallas.1} parent=31 // pred_region
          %s217 = sand.u32 %s29, 1
          %s218 = scalar_lea.sflag [#allocation3], %s217
          %s219 = sand.u32 %s29, 1
          %s220 = smul.addr %s219, 16
          %s221 = scalar_lea.vmem [#allocation2], %s220
          %s222 = smul.u32 2, %s19
          %s224 = ssub.s32 256, 256
          %225 = vsyncadd %s218, %s224
          %s226 = smul.addr %s222, 128
          %s227 = scalar_lea.hbm %s0, %s226
          %s228 = sshll.u32 %s221, 4
          %s229 = int_to_ptr.vmem [resolvable:$true] %s228
          %234 = dma.hbm_to_vmem [thread:$0]  %s227, 256, %s229, %s218, 128, 128, 8
        $region36: #{qkv_pallas.1} parent=31 // pred_fallthru
          _
      $region32: #{qkv_pallas.1} parent=5 // pred_fallthru
        _
      %p235 = scmp.le.s32.totalorder 1, %s19
      %p236 = scmp.lt.s32.totalorder %s19, 3
      %p237 = pnand %p235, %p236
      %p238 = pneg %p237
      // Predicated region
      $region37: #{qkv_pallas.1} parent=5 // pred_check
        _
      $region38: #{qkv_pallas.1} parent=5 // pred_check_branch
        %240 = sbr.rel (%p237) target = $region40
      $region39: #{qkv_pallas.1} parent=5 // pred_region
        %s241 = ssub.s32 %s19, 1
        %s242 = sand.u32 %s32, 1
        %s243 = scalar_lea.sflag [#allocation3], %s242
        %s244 = sand.u32 %s32, 1
        %s245 = smul.addr %s244, 16
        %s246 = scalar_lea.vmem [#allocation2], %s245
        // Predicated region
        $region41: #{qkv_pallas.1} parent=39 // pred_check
          %p247 = pneg %p45
        $region42: #{qkv_pallas.1} parent=39 // pred_check_branch
          %249 = sbr.rel (%p247) target = $region44
        $region43: #{qkv_pallas.1} parent=39 // pred_region
          %250 = dma.done %s243, 256
        $region44: #{qkv_pallas.1} parent=39 // pred_fallthru
          _
        // Predicated region
        $region45: #{qkv_pallas.1} parent=39 // pred_check
          %p251 = pneg %p66
        $region46: #{qkv_pallas.1} parent=39 // pred_check_branch
          %253 = sbr.rel (%p251) target = $region48
        $region47: #{qkv_pallas.1} parent=39 // pred_region
          %254 = dma.done [#allocation6], 256
        $region48: #{qkv_pallas.1} parent=39 // pred_fallthru
          _
        // Predicated region
        $region49: #{qkv_pallas.1} parent=39 // pred_check
          %p255 = pneg %p87
        $region50: #{qkv_pallas.1} parent=39 // pred_check_branch
          %257 = sbr.rel (%p255) target = $region52
        $region51: #{qkv_pallas.1} parent=39 // pred_region
          %258 = dma.done [#allocation6], 64
        $region52: #{qkv_pallas.1} parent=39 // pred_fallthru
          _
        // Predicated region
        $region53: #{qkv_pallas.1} parent=39 // pred_check
          %p259 = pneg %p108
        $region54: #{qkv_pallas.1} parent=39 // pred_check_branch
          %261 = sbr.rel (%p259) target = $region56
        $region55: #{qkv_pallas.1} parent=39 // pred_region
          %262 = dma.done [#allocation9], 1024
        $region56: #{qkv_pallas.1} parent=39 // pred_fallthru
          _
        %s263 = sand.u32 %s32, 1
        %s264 = scalar_lea.sflag [#allocation3], %s263
        %s265 = sand.u32 %s32, 1
        %s266 = smul.addr %s265, 16
        %s267 = scalar_lea.vmem [#allocation2], %s266
        %p268 = pneg %p45
        %p269 = pneg %p42
        %p270 = pneg %p66
        %p271 = pneg %p63
        %p272 = pneg %p87
        %p273 = pneg %p84
        %p274 = pneg %p108
        %p275 = pneg %p105
        %p276 = pneg %p129
        %p277 = pneg %p126
        %p278 = pneg %p155
        %p279 = pneg %p152
        %s280 = sand.u32 %s142, 1
        %s281 = scalar_lea.sflag [#allocation4], %s280
        %s282 = sand.u32 %s142, 1
        %s283 = smul.addr %s282, 16
        %s284 = scalar_lea.vmem [#allocation10], %s283
        %s285 = smul.u32 2, %s24
        %s286 = smul.u32 2, %s24
        %v288 = vld [vmem:[%s246] sm:$0xff]
        %v289 = vld [vmem:[%s246 + $0x8] sm:$0xff]
        %v290 = vpack.c.bf16 %v289, %v288
        %v291 = vld [vmem:[#allocation5] sm:$0xf]
        %v292 = vld [vmem:[#allocation5 + $0x4] sm:$0xf]
        %v293 = vld [vmem:[#allocation5 + $0x8] sm:$0xf]
        %v294 = vld [vmem:[#allocation5 + $0xc] sm:$0xf]
        %v295 = vld [vmem:[#allocation7] sm:$0x1]
        %v296 = vlaneseq
        %v297 = vshrl.u32 %v296, 7
        %v298 = vsub.s32 0, %v297
        %v299 = vrot.slane %v295, %v298
        %v304 = vunpack.c.l.b16 %v291
        %v305 = vunpack.c.l.b16 %v292
        %v306 = vunpack.c.l.b16 %v293
        %v307 = vunpack.c.l.b16 %v294
        %v308 = vpack.c.b16 %v305, %v304
        %v309 = vpack.c.b16 %v307, %v306
        %vm312 = vcmask 261120
        %v314 = vsel %vm312, %v290, 0
        %316 = vmatprep.subr.bf16.mxu0 0
        %317 = vmatpush1.bf16.msra.mxu0 0
        %318 = vmatprep.subr.bf16.mxu0 0
        %319 = vmatpush1.bf16.msra.mxu0 0
        %320 = vmatprep.subr.bf16.mxu0 0
        %321 = vmatpush1.bf16.msra.mxu0 0
        %322 = vmatprep.subr.bf16.mxu0 0
        %323 = vmatpush1.bf16.msra.mxu0 0
        %324 = vmatprep.subr.bf16.mxu0 0
        %325 = vmatpush1.bf16.msra.mxu0 0
        %326 = vmatprep.subr.bf16.mxu0 0
        %327 = vmatpush1.bf16.msra.mxu0 0
        %328 = vmatprep.subr.bf16.mxu0 0
        %329 = vmatpush1.bf16.msra.mxu0 %v309
        %330 = vmatprep.subr.bf16.mxu0 0
        %331 = vmatpush1.bf16.msra.mxu0 %v308
        %332 = vmatprep.subr.bf16.mxu0 0
        %333 = vmatpush2.bf16.msra.mxu0 0
        %334 = vmatprep.subr.bf16.mxu0 0
        %335 = vmatpush2.bf16.msra.mxu0 0
        %336 = vmatprep.subr.bf16.mxu0 0
        %337 = vmatpush2.bf16.msra.mxu0 0
        %338 = vmatprep.subr.bf16.mxu0 0
        %339 = vmatpush2.bf16.msra.mxu0 0
        %340 = vmatprep.subr.bf16.mxu0 0
        %341 = vmatpush2.bf16.msra.mxu0 0
        %342 = vmatprep.subr.bf16.mxu0 0
        %343 = vmatpush2.bf16.msra.mxu0 0
        %344 = vmatprep.subr.bf16.mxu0 0
        %345 = vmatpush2.bf16.msra.mxu0 0
        %346 = vmatprep.subr.bf16.mxu0 0
        %347 = vmatpush2.bf16.msra.mxu0 0
        %348 = vmatprep.mubr.bf16.mxu0 0
        %349 = vmatmul.mubr.bf16.gmra.mxu0 %v314
        %v350 = vpop.f32.mrf.mxu0
        %v351 = vadd.f32 %v299, %v350
        %v352 = vpop.f32.mrf.mxu0
        %v353 = vpop.f32.mrf.mxu0
        %v354 = vadd.f32 %v299, %v353
        %v355 = vpop.f32.mrf.mxu0
        %356 = vdwg.mxu0
        %v357 = vxor.u32 %v351, 2147483648
        %v358 = vxor.u32 %v354, 2147483648
        %v359 = vmul.f32 %v357, 1.442695
        %v360 = vpow.pop %v359
        %v361 = vmul.f32 %v358, 1.442695
        %v362 = vpow.pop %v361
        %v363 = vadd.f32 %v360, 1.0
        %v364 = vadd.f32 %v362, 1.0
        %v365 = vrcp.pop %v363
        %v366 = vmul.f32 1.0, %v365
        %v367 = vrcp.pop %v364
        %v368 = vmul.f32 1.0, %v367
        %v369 = vmul.f32 %v351, %v366
        %v370 = vmul.f32 %v354, %v368
        %371 = vadd.xlane.f32.xlu0 %v369
        %v372 = vpop.xlane.xlu0 %371
        %373 = vadd.xlane.f32.xlu0 %v370
        %v374 = vpop.xlane.xlu0 %373
        %v375 = vmul.f32 %v372, 0.03125
        %v376 = vmul.f32 %v374, 0.03125
        %v377 = vsub.f32 %v369, %v375
        %v378 = vsub.f32 %v370, %v376
        %v379 = vlaneseq
        %v380 = vand.u32 %v379, 127
        %vm381 = vcmp.lt.s32.totalorder %v380, 32
        %v382 = vsel %vm381, 1, 0
        %vm383 = vcmp.eq.s32.totalorder %v382, 1
        %v384 = vsel %vm383, %v377, 0.0
        %v385 = vsel %vm383, %v378, 0.0
        %v386 = vmul.f32 %v384, %v384
        %v387 = vmul.f32 %v385, %v385
        %388 = vadd.xlane.f32.xlu0 %v386
        %v389 = vpop.xlane.xlu0 %388
        %390 = vadd.xlane.f32.xlu0 %v387
        %v391 = vpop.xlane.xlu0 %390
        %v392 = vmul.f32 %v389, 0.03125
        %v393 = vmul.f32 %v391, 0.03125
        %v394 = vadd.f32 %v392, 1e-05
        %v395 = vadd.f32 %v393, 1e-05
        %v396 = vrsqrt.pop %v394
        %v397 = vrsqrt.pop %v395
        %v398 = vmul.f32 %v377, %v396
        %v399 = vmul.f32 %v378, %v397
        %v400 = vld [vmem:[#allocation7 + $0x1] sm:$0x1]
        %v401 = vlaneseq
        %v402 = vshrl.u32 %v401, 7
        %v403 = vsub.s32 0, %v402
        %v404 = vrot.slane %v400, %v403
        %v405 = vmul.f32 %v398, %v404
        %v406 = vmul.f32 %v399, %v404
        %v407 = vld [vmem:[#allocation7 + $0x2] sm:$0x1]
        %v408 = vlaneseq
        %v409 = vshrl.u32 %v408, 7
        %v410 = vsub.s32 0, %v409
        %v411 = vrot.slane %v407, %v410
        %v412 = vadd.f32 %v405, %v411
        %v413 = vadd.f32 %v406, %v411
        %v414 = vpack.c.bf16 %v413, %v412
        %v415 = vld [vmem:[#allocation8] sm:$0xf]
        %v416 = vld [vmem:[#allocation8 + $0x4] sm:$0xf]
        %v417 = vld [vmem:[#allocation8 + $0x8] sm:$0xf]
        %v418 = vld [vmem:[#allocation8 + $0xc] sm:$0xf]
        %v419 = vld [vmem:[#allocation8 + $0x10] sm:$0xf]
        %v420 = vld [vmem:[#allocation8 + $0x14] sm:$0xf]
        %v421 = vld [vmem:[#allocation8 + $0x18] sm:$0xf]
        %v422 = vld [vmem:[#allocation8 + $0x1c] sm:$0xf]
        %v423 = vld [vmem:[#allocation8 + $0x20] sm:$0xf]
        %v424 = vld [vmem:[#allocation8 + $0x24] sm:$0xf]
        %v425 = vld [vmem:[#allocation8 + $0x28] sm:$0xf]
        %v426 = vld [vmem:[#allocation8 + $0x2c] sm:$0xf]
        %v427 = vld [vmem:[#allocation8 + $0x30] sm:$0xf]
        %v428 = vld [vmem:[#allocation8 + $0x34] sm:$0xf]
        %v429 = vld [vmem:[#allocation8 + $0x38] sm:$0xf]
        %v430 = vld [vmem:[#allocation8 + $0x3c] sm:$0xf]
        %v431 = vld [vmem:[%s4] sm:$0x1]
        %v433 = vlaneseq
        %v434 = vshrl.u32 %v433, 7
        %v435 = vsub.s32 0, %v434
        %v436 = vrot.slane %v431, %v435
        %v454 = vunpack.c.l.b16 %v415
        %v455 = vunpack.c.l.b16 %v416
        %v456 = vunpack.c.l.b16 %v417
        %v457 = vunpack.c.l.b16 %v418
        %v458 = vunpack.c.l.b16 %v419
        %v459 = vunpack.c.l.b16 %v420
        %v460 = vunpack.c.l.b16 %v421
        %v461 = vunpack.c.l.b16 %v422
        %v462 = vunpack.c.l.b16 %v423
        %v463 = vunpack.c.l.b16 %v424
        %v464 = vunpack.c.l.b16 %v425
        %v465 = vunpack.c.l.b16 %v426
        %v466 = vunpack.c.l.b16 %v427
        %v467 = vunpack.c.l.b16 %v428
        %v468 = vunpack.c.l.b16 %v429
        %v469 = vunpack.c.l.b16 %v430
        %v470 = vpack.c.b16 %v455, %v454
        %v471 = vpack.c.b16 %v457, %v456
        %v472 = vpack.c.b16 %v459, %v458
        %v473 = vpack.c.b16 %v461, %v460
        %v474 = vpack.c.b16 %v463, %v462
        %v475 = vpack.c.b16 %v465, %v464
        %v476 = vpack.c.b16 %v467, %v466
        %v477 = vpack.c.b16 %v469, %v468
        %486 = vmatprep.subr.bf16.mxu0 0
        %487 = vmatpush1.bf16.msra.mxu0 %v477
        %488 = vmatprep.subr.bf16.mxu0 0
        %489 = vmatpush1.bf16.msra.mxu0 %v476
        %490 = vmatprep.subr.bf16.mxu0 0
        %491 = vmatpush1.bf16.msra.mxu0 %v475
        %492 = vmatprep.subr.bf16.mxu0 0
        %493 = vmatpush1.bf16.msra.mxu0 %v474
        %494 = vmatprep.subr.bf16.mxu0 0
        %495 = vmatpush1.bf16.msra.mxu0 %v473
        %496 = vmatprep.subr.bf16.mxu0 0
        %497 = vmatpush1.bf16.msra.mxu0 %v472
        %498 = vmatprep.subr.bf16.mxu0 0
        %499 = vmatpush1.bf16.msra.mxu0 %v471
        %500 = vmatprep.subr.bf16.mxu0 0
        %501 = vmatpush1.bf16.msra.mxu0 %v470
        %502 = vmatprep.subr.bf16.mxu0 0
        %503 = vmatpush2.bf16.msra.mxu0 0
        %504 = vmatprep.subr.bf16.mxu0 0
        %505 = vmatpush2.bf16.msra.mxu0 0
        %506 = vmatprep.subr.bf16.mxu0 0
        %507 = vmatpush2.bf16.msra.mxu0 0
        %508 = vmatprep.subr.bf16.mxu0 0
        %509 = vmatpush2.bf16.msra.mxu0 0
        %510 = vmatprep.subr.bf16.mxu0 0
        %511 = vmatpush2.bf16.msra.mxu0 0
        %512 = vmatprep.subr.bf16.mxu0 0
        %513 = vmatpush2.bf16.msra.mxu0 0
        %514 = vmatprep.subr.bf16.mxu0 0
        %515 = vmatpush2.bf16.msra.mxu0 0
        %516 = vmatprep.subr.bf16.mxu0 0
        %517 = vmatpush2.bf16.msra.mxu0 0
        %518 = vmatprep.mubr.bf16.mxu0 0
        %519 = vmatmul.mubr.bf16.gmra.mxu0 %v414
        %v520 = vpop.f32.mrf.mxu0
        %v521 = vadd.f32 %v436, %v520
        %v522 = vpop.f32.mrf.mxu0
        %v523 = vpop.f32.mrf.mxu0
        %v524 = vadd.f32 %v436, %v523
        %v525 = vpop.f32.mrf.mxu0
        %526 = vdwg.mxu0
        %527 = vst [vmem:[%s284] sm:$0xff] %v521
        %528 = vst [vmem:[%s284 + $0x8] sm:$0xff] %v524
        %s529 = sand.u32 %s142, 1
        %s530 = scalar_lea.sflag [#allocation4], %s529
        %s531 = sand.u32 %s142, 1
        %s532 = smul.addr %s531, 16
        %s533 = scalar_lea.vmem [#allocation10], %s532
        // Predicated region
        $region57: #{qkv_pallas.1} parent=39 // pred_check
          %p534 = pneg %p152
        $region58: #{qkv_pallas.1} parent=39 // pred_check_branch
          %536 = sbr.rel (%p534) target = $region60
        $region59: #{qkv_pallas.1} parent=39 // pred_region
          %s537 = smul.u32 2, %s24
          %s539 = ssub.s32 256, 256
          %540 = vsyncadd %s530, %s539
          %s541 = smul.addr %s537, 128
          %s542 = scalar_lea.hbm %s5, %s541
          %s543 = sshll.u32 %s533, 4
          %s544 = int_to_ptr.vmem [resolvable:$true] %s543
          %549 = dma.vmem_to_hbm [thread:$0]  %s544, 256, %s542, %s530, 128, 128, 8
        $region60: #{qkv_pallas.1} parent=39 // pred_fallthru
          _
      $region40: #{qkv_pallas.1} parent=5 // pred_fallthru
        _
      %p550 = scmp.le.s32.totalorder 2, %s19
      // Predicated region
      $region61: #{qkv_pallas.1} parent=5 // pred_check
        %p551 = pneg %p550
      $region62: #{qkv_pallas.1} parent=5 // pred_check_branch
        %553 = sbr.rel (%p551) target = $region64
      $region63: #{qkv_pallas.1} parent=5 // pred_region
        %s554 = ssub.s32 %s19, 2
        // Predicated region
        $region65: #{qkv_pallas.1} parent=63 // pred_check
          %p555 = pneg %p158
        $region66: #{qkv_pallas.1} parent=63 // pred_check_branch
          %557 = sbr.rel (%p555) target = $region68
        $region67: #{qkv_pallas.1} parent=63 // pred_region
          %s558 = sand.u32 %s143, 1
          %s559 = scalar_lea.sflag [#allocation4], %s558
          %s560 = sand.u32 %s143, 1
          %s561 = smul.addr %s560, 16
          %s562 = scalar_lea.vmem [#allocation10], %s561
          %563 = dma.done %s559, 256
        $region68: #{qkv_pallas.1} parent=63 // pred_fallthru
          _
      $region64: #{qkv_pallas.1} parent=5 // pred_fallthru
        _
    $region6: #{qkv_pallas.1} parent=1 // loop_footer
      %s23 = sadd.s32 1, %s19
    $region7: #{qkv_pallas.1} parent=1 // loop_footer_branch
      %18 = sbr.rel target = $region3
    $region8: #{qkv_pallas.1} parent=1 // loop_exit
      _
    %564 = vsyncpa [#allocation3], 1
    %s565 = scalar_lea.sflag [#allocation3], 1
    %566 = vsyncpa %s565, 1
    %567 = vsyncpa [#allocation6], 1
    %568 = vsyncpa [#allocation9], 1
    %569 = vsyncpa [#allocation4], 1
    %s570 = scalar_lea.sflag [#allocation4], 1
    %571 = vsyncpa %s570, 1

</llo_original>
